<compile_context>
chip_gen: v6e
topology: v6e:2x2x1
jax: 0.10.0
libtpu: 0.0.40
codegen_flags: <defaults>
</compile_context>

<pallas_src>
import jax
import jax.numpy as jnp
from jax.experimental import pallas as pl
from jax.experimental.pallas import tpu as pltpu

_LANE = 128
_ROW_ALIGN = 16  # bf16 sublane packing for the in-kernel cast; also fine for f32


def _round_up(x, m):
    return ((x + m - 1) // m) * m


def _cdiv(a, b):
    return -(-a // b)


def _mlp_kernel(x_ref, w1_ref, b1_ref, w2_ref, b2_ref, o_ref):
    # x_ref : (TB, K)  f32  (streamed over the batch grid axis)
    # w1_ref: (K, H)   compute dtype (VMEM-resident, constant index_map)
    # b1_ref: (1, H)   f32  (resident)
    # w2_ref: (H, N)   compute dtype (resident)
    # b2_ref: (1, N)   f32  (resident)
    # o_ref : (TB, N)  f32  (streamed)
    #
    # Cast the MXU *input* in-vreg; HBM only ever sees f32 activations.
    x = x_ref[...].astype(w1_ref.dtype)
    h = jnp.dot(x, w1_ref[...], preferred_element_type=jnp.float32)
    h = jnp.maximum(h + b1_ref[...], 0.0)          # f32 bias add + ReLU on the VPU
    out = jnp.dot(h.astype(w2_ref.dtype), w2_ref[...],
                  preferred_element_type=jnp.float32)
    o_ref[...] = (out + b2_ref[...]).astype(o_ref.dtype)


def kala_ai_forward(x, w1, b1, w2, b2, *, compute_dtype=jnp.bfloat16, block_b=512):
    """KalaAI forward pass as a single batch-tiled Pallas kernel.

    x : (B, input_size) float
    w1: (input_size, hidden_size),  b1: (1, hidden_size) or (hidden_size,)
    w2: (hidden_size, output_size), b2: (1, output_size) or (output_size,)
    compute_dtype: dtype fed to the MXU. bf16 (default) is the fast path with
      explicit f32 accumulation; f32 is an exactness/debug mode (multi-pass MXU
      emulation on v5e/v6e).
    Returns (B, output_size) f32.
    """
    B, K = x.shape
    Kw, H = w1.shape
    Hw, N = w2.shape
    assert K == Kw and H == Hw, "weight shapes must be [in, out]"

    # Activations stay f32 in HBM; MXU cast happens inside the kernel.
    x = x.astype(jnp.float32)
    # Weight casts are no-ops if the caller already stores them in compute_dtype.
    w1c = w1.astype(compute_dtype)
    w2c = w2.astype(compute_dtype)
    b1f = jnp.reshape(b1, (1, H)).astype(jnp.float32)
    b2f = jnp.reshape(b2, (1, N)).astype(jnp.float32)

    # ---- batch tiling: large tiles, small padding, >=2 grid steps when possible
    B_up = _round_up(B, _ROW_ALIGN)
    tb_cap = max(_ROW_ALIGN, _round_up(min(block_b, B_up), _ROW_ALIGN))
    n_steps = _cdiv(B_up, tb_cap)
    if n_steps == 1 and B_up >= 2 * _ROW_ALIGN:
        n_steps = 2                      # keep v7x's second TensorCore busy
    TB = _round_up(_cdiv(B_up, n_steps), _ROW_ALIGN)
    Bp = TB * n_steps
    if Bp != B:
        x = jnp.pad(x, ((0, Bp - B), (0, 0)))
    grid = (n_steps,)

    # ---- VMEM budget: streamed tiles and resident weights are BOTH
    #      double-buffered by the Pallas pipeline (even with a constant
    #      index_map), so count 2x for everything.
    itm = jnp.dtype(compute_dtype).itemsize
    streamed = 2 * (TB * K * 4 + TB * N * 4)                    # x tile + out tile (f32)
    resident = 2 * ((K * H + H * N) * itm + (H + N) * 4)        # W1, W2, b1, b2
    budget = streamed + resident
    try:
        vmem_cap = int(pltpu.get_tpu_info().vmem_capacity_bytes)
    except Exception:
        vmem_cap = 64 * 1024 * 1024      # safe floor: v7x per-TC capacity
    vmem_cap = int(vmem_cap * 0.85)      # headroom for Mosaic internal scratch
    # TODO(synk): if resident weights ever exceed the cap (very large H), switch
    # to a 2-D (batch x hidden-tile) grid with an f32 VMEM accumulator and
    # pl.when init/finalize instead of the weights-resident design.
    assert budget < vmem_cap, (
        f"resident-weight design needs ~{budget >> 20} MiB VMEM but only "
        f"{vmem_cap >> 20} MiB is available; tile the hidden axis instead")
    vmem_limit = int(min(max(budget + (4 << 20), 32 << 20), vmem_cap))

    # ---- advisory cost estimate so XLA overlaps the surrounding pad/slice ops
    flops = 2 * Bp * (K * H + H * N)
    bytes_accessed = (Bp * K * 4 + K * H * itm + H * 4
                      + H * N * itm + N * 4 + Bp * N * 4)
    cost = pl.CostEstimate(flops=flops, transcendentals=0,
                           bytes_accessed=bytes_accessed)

    out_padded = pl.pallas_call(
        _mlp_kernel,
        out_shape=jax.ShapeDtypeStruct((Bp, N), jnp.float32),
        grid=grid,
        in_specs=[
            pl.BlockSpec((TB, K), lambda i: (i, 0)),    # x: streamed over batch
            pl.BlockSpec((K, H), lambda i: (0, 0)),     # W1: VMEM-resident
            pl.BlockSpec((1, H), lambda i: (0, 0)),     # b1: VMEM-resident
            pl.BlockSpec((H, N), lambda i: (0, 0)),     # W2: VMEM-resident
            pl.BlockSpec((1, N), lambda i: (0, 0)),     # b2: VMEM-resident
        ],
        out_specs=pl.BlockSpec((TB, N), lambda i: (i, 0)),
        compiler_params=pltpu.CompilerParams(
            dimension_semantics=("parallel",),          # batch axis -> both TCs on v7x
            vmem_limit_bytes=vmem_limit,
        ),
        cost_estimate=cost,
    )(x, w1c, b1f, w2c, b2f)

    # Only batch padding to slice away (output columns are exact-width).
    return out_padded[:B] if Bp != B else out_padded


def _ref_forward(x, w1, b1, w2, b2):
    h = jnp.maximum(x @ w1 + jnp.reshape(b1, (1, -1)), 0.0)
    return h @ w2 + jnp.reshape(b2, (1, -1))


if __name__ == "__main__":
    # Shapes implied by KalaAI(input_size, hidden_size, output_size)
    batch = 8
    input_size = 32
    hidden_size = 64
    output_size = 16

    key = jax.random.PRNGKey(0)
    kx, k1, kb1, k2, kb2, kx2 = jax.random.split(key, 6)

    x = jax.random.normal(kx, (batch, input_size), dtype=jnp.float32)

    # Deterministic parameter init (mimics nn.Linear's uniform(-1/sqrt(fan_in), ...))
    bound1 = 1.0 / (input_size ** 0.5)
    w1 = jax.random.uniform(k1, (input_size, hidden_size),
                            minval=-bound1, maxval=bound1, dtype=jnp.float32)
    b1 = jax.random.uniform(kb1, (1, hidden_size),
                            minval=-bound1, maxval=bound1, dtype=jnp.float32)

    bound2 = 1.0 / (hidden_size ** 0.5)
    w2 = jax.random.uniform(k2, (hidden_size, output_size),
                            minval=-bound2, maxval=bound2, dtype=jnp.float32)
    b2 = jax.random.uniform(kb2, (1, output_size),
                            minval=-bound2, maxval=bound2, dtype=jnp.float32)

    ref = _ref_forward(x, w1, b1, w2, b2)

    # 1) Exact-path check (f32 MXU inputs): tight tolerance vs the f32 reference.
    out_f32 = kala_ai_forward(x, w1, b1, w2, b2, compute_dtype=jnp.float32)
    out_f32 = jax.block_until_ready(out_f32)
    assert out_f32.shape == (batch, output_size)
    assert jnp.allclose(out_f32, ref, atol=1e-5, rtol=1e-5)

    # 2) Fast path: weights pre-cast to bf16 ONCE by the caller (the wrapper's
    #    astype is then a no-op); x stays f32 and is cast inside the kernel.
    w1_bf16 = w1.astype(jnp.bfloat16)
    w2_bf16 = w2.astype(jnp.bfloat16)
    out_bf16 = kala_ai_forward(x, w1_bf16, b1, w2_bf16, b2,
                               compute_dtype=jnp.bfloat16)
    out_bf16 = jax.block_until_ready(out_bf16)
    assert out_bf16.shape == (batch, output_size)
    assert jnp.allclose(out_bf16, ref, atol=2e-2, rtol=2e-2)

    # 3) Multi-tile grid path (B not a multiple of the tile): exercises the
    #    streamed-activation / resident-weight pipeline with >= 2 grid steps
    #    and small batch padding (B=200 -> TB=112, Bp=224).
    batch_big = 200
    x_big = jax.random.normal(kx2, (batch_big, input_size), dtype=jnp.float32)
    ref_big = _ref_forward(x_big, w1, b1, w2, b2)
    out_big = kala_ai_forward(x_big, w1, b1, w2, b2, compute_dtype=jnp.float32)
    out_big = jax.block_until_ready(out_big)
    assert out_big.shape == (batch_big, output_size)
    assert jnp.allclose(out_big, ref_big, atol=1e-5, rtol=1e-5)

    print("KERNEL_OK")
</pallas_src>

<mosaic_0001>
module attributes {stable_mosaic.version = 11 : i64} {
  func.func @_mlp_kernel(%arg0: i32, %arg1: memref<16x32xf32, #tpu.memory_space<vmem>>, %arg2: memref<32x64xf32, #tpu.memory_space<vmem>>, %arg3: memref<1x64xf32, #tpu.memory_space<vmem>>, %arg4: memref<64x16xf32, #tpu.memory_space<vmem>>, %arg5: memref<1x16xf32, #tpu.memory_space<vmem>>, %arg6: memref<16x16xf32, #tpu.memory_space<vmem>>) attributes {dimension_semantics = [#tpu.dimension_semantics<parallel>], iteration_bounds = array<i64: 1>, scalar_prefetch = 0 : i64, scratch_operands = 0 : i64, tpu.core_type = #tpu.core_type<tc>, window_params = [{transform_indices = @transform_0, window_bounds = array<i64: 16, 32>}, {pipeline_mode = #tpu.pipeline_mode<synchronous>, transform_indices = @transform_1, window_bounds = array<i64: 32, 64>}, {pipeline_mode = #tpu.pipeline_mode<synchronous>, transform_indices = @transform_2, window_bounds = array<i64: 1, 64>}, {pipeline_mode = #tpu.pipeline_mode<synchronous>, transform_indices = @transform_3, window_bounds = array<i64: 64, 16>}, {pipeline_mode = #tpu.pipeline_mode<synchronous>, transform_indices = @transform_4, window_bounds = array<i64: 1, 16>}, {transform_indices = @transform_5, window_bounds = array<i64: 16, 16>}]} {
    %c0 = arith.constant 0 : index
    %c0_0 = arith.constant 0 : index
    %0 = vector.load %arg1[%c0, %c0_0] : memref<16x32xf32, #tpu.memory_space<vmem>>, vector<16x32xf32>
    %c0_1 = arith.constant 0 : index
    %c0_2 = arith.constant 0 : index
    %1 = vector.load %arg2[%c0_1, %c0_2] : memref<32x64xf32, #tpu.memory_space<vmem>>, vector<32x64xf32>
    %cst = arith.constant dense<0.000000e+00> : vector<16x64xf32>
    %2 = tpu.matmul %0, %1, %cst {dimension_numbers = #tpu.dot_dimension_numbers<[1], [0], [0], [1], [0, 0, 1, 1], [], []>} : vector<16x32xf32>, vector<32x64xf32>, vector<16x64xf32> -> vector<16x64xf32>
    %c0_3 = arith.constant 0 : index
    %c0_4 = arith.constant 0 : index
    %3 = vector.load %arg3[%c0_3, %c0_4] : memref<1x64xf32, #tpu.memory_space<vmem>>, vector<1x64xf32>
    %4 = vector.broadcast %3 : vector<1x64xf32> to vector<16x64xf32>
    %5 = arith.addf %2, %4 : vector<16x64xf32>
    %cst_5 = arith.constant 0.000000e+00 : f32
    %6 = vector.broadcast %cst_5 : f32 to vector<16x64xf32>
    %7 = arith.maximumf %5, %6 : vector<16x64xf32>
    %c0_6 = arith.constant 0 : index
    %c0_7 = arith.constant 0 : index
    %8 = vector.load %arg4[%c0_6, %c0_7] : memref<64x16xf32, #tpu.memory_space<vmem>>, vector<64x16xf32>
    %cst_8 = arith.constant dense<0.000000e+00> : vector<16x16xf32>
    %9 = tpu.matmul %7, %8, %cst_8 {dimension_numbers = #tpu.dot_dimension_numbers<[1], [0], [0], [1], [0, 0, 1, 1], [], []>} : vector<16x64xf32>, vector<64x16xf32>, vector<16x16xf32> -> vector<16x16xf32>
    %c0_9 = arith.constant 0 : index
    %c0_10 = arith.constant 0 : index
    %10 = vector.load %arg5[%c0_9, %c0_10] : memref<1x16xf32, #tpu.memory_space<vmem>>, vector<1x16xf32>
    %11 = vector.broadcast %10 : vector<1x16xf32> to vector<16x16xf32>
    %12 = arith.addf %9, %11 : vector<16x16xf32>
    %c0_11 = arith.constant 0 : index
    %c0_12 = arith.constant 0 : index
    %13 = vector.load %arg6[%c0_11, %c0_12] : memref<16x16xf32, #tpu.memory_space<vmem>>, vector<16x16xf32>
    tpu.vector_store %arg6[%c0_11, %c0_12], %12 {strides = array<i32>} : memref<16x16xf32, #tpu.memory_space<vmem>>, vector<16x16xf32>,
    return
  }
  func.func @transform_0(%arg0: i32) -> (i32, i32) {
    %c0_i32 = arith.constant 0 : i32
    %c0_i32_0 = arith.constant 0 : i32
    return %arg0, %c0_i32 : i32, i32
  }
  func.func @transform_1(%arg0: i32) -> (i32, i32) {
    %c0_i32 = arith.constant 0 : i32
    %c0_i32_0 = arith.constant 0 : i32
    %c0_i32_1 = arith.constant 0 : i32
    return %c0_i32, %c0_i32_0 : i32, i32
  }
  func.func @transform_2(%arg0: i32) -> (i32, i32) {
    %c0_i32 = arith.constant 0 : i32
    %c0_i32_0 = arith.constant 0 : i32
    %c0_i32_1 = arith.constant 0 : i32
    return %c0_i32, %c0_i32_0 : i32, i32
  }
  func.func @transform_3(%arg0: i32) -> (i32, i32) {
    %c0_i32 = arith.constant 0 : i32
    %c0_i32_0 = arith.constant 0 : i32
    %c0_i32_1 = arith.constant 0 : i32
    return %c0_i32, %c0_i32_0 : i32, i32
  }
  func.func @transform_4(%arg0: i32) -> (i32, i32) {
    %c0_i32 = arith.constant 0 : i32
    %c0_i32_0 = arith.constant 0 : i32
    %c0_i32_1 = arith.constant 0 : i32
    return %c0_i32, %c0_i32_0 : i32, i32
  }
  func.func @transform_5(%arg0: i32) -> (i32, i32) {
    %c0_i32 = arith.constant 0 : i32
    %c0_i32_0 = arith.constant 0 : i32
    return %arg0, %c0_i32 : i32, i32
  }
}

</mosaic_0001>

<llo_original>
// kernel: tpu_custom_call.1
$region0: #{tpu_custom_call.1}
  #allocation0 [shape = 'u32[]', space=smem, size = 0x4, offset = 0x4, fixed_abs, tag = 'smem constant byte address 0x4 - core index']
  #allocation1 [shape = 'u32[144,128]{1,0:T(1,128)}', space=vmem, size = 0x12000, scoped, tag = 'internal scratch']
  %s0 = inlined_call_operand.vmem [shape: f32[16,32], index: 0, kind: input, shape index: {}]
  %s1 = inlined_call_operand.vmem [shape: f32[32,64], index: 1, kind: input, shape index: {}]
  %s2 = inlined_call_operand.vmem [shape: f32[1,64], index: 2, kind: input, shape index: {}]
  %s3 = inlined_call_operand.vmem [shape: f32[64,16], index: 3, kind: input, shape index: {}]
  %s4 = inlined_call_operand.vmem [shape: f32[1,16], index: 4, kind: input, shape index: {}]
  %s5 = inlined_call_operand.hbm [shape: f32[16,16], index: 5, kind: output, shape index: {}]
  %s6 = sld [smem:[#allocation0]]
  $region30: #{tpu_custom_call.1} parent=0
    _
  %s8 = ssub.s32 1, %s6
  %s9 = scalar_select 0, %s8, %s6
  $region1: #{tpu_custom_call.1} parent=0
    #allocation2 [shape = 'u8[8192]{0}', space=vmem, size = 0x2000, scoped, tag = 'output window, operand 0, single buffered']
    #allocation3 [shape = 's32[1]{0}', space=sflag, size = 0x4, scoped, tag = 'scoped memory for tpu_custom_call.1']
    %10 = vsyncpa [#allocation3], 0
    // Predicated region
    $region2: #{tpu_custom_call.1} parent=1 // pred_check
      _
    $region3: #{tpu_custom_call.1} parent=1 // pred_check_branch
      %12 = sbr.rel (0) target = $region5
    $region4: #{tpu_custom_call.1} parent=1 // pred_region
      _
    $region5: #{tpu_custom_call.1} parent=1 // pred_fallthru
      _
    // Predicated region
    $region6: #{tpu_custom_call.1} parent=1 // pred_check
      _
    $region7: #{tpu_custom_call.1} parent=1 // pred_check_branch
      %14 = sbr.rel (0) target = $region9
    $region8: #{tpu_custom_call.1} parent=1 // pred_region
      _
    $region9: #{tpu_custom_call.1} parent=1 // pred_fallthru
      _
    // Predicated region
    $region10: #{tpu_custom_call.1} parent=1 // pred_check
      _
    $region11: #{tpu_custom_call.1} parent=1 // pred_check_branch
      %16 = sbr.rel (0) target = $region13
    $region12: #{tpu_custom_call.1} parent=1 // pred_region
      _
    $region13: #{tpu_custom_call.1} parent=1 // pred_fallthru
      _
    // Predicated region
    $region14: #{tpu_custom_call.1} parent=1 // pred_check
      _
    $region15: #{tpu_custom_call.1} parent=1 // pred_check_branch
      %18 = sbr.rel (0) target = $region17
    $region16: #{tpu_custom_call.1} parent=1 // pred_region
      _
    $region17: #{tpu_custom_call.1} parent=1 // pred_fallthru
      _
    // Predicated region
    $region18: #{tpu_custom_call.1} parent=1 // pred_check
      _
    $region19: #{tpu_custom_call.1} parent=1 // pred_check_branch
      %20 = sbr.rel (0) target = $region21
    $region20: #{tpu_custom_call.1} parent=1 // pred_region
      _
    $region21: #{tpu_custom_call.1} parent=1 // pred_fallthru
      _
    %v21 = vld [vmem:[%s0] sm:$0xff]
    %v22 = vld [vmem:[%s0 + $0x8] sm:$0xff]
    %v23 = vld [vmem:[%s1] sm:$0xff]
    %v24 = vld [vmem:[%s1 + $0x8] sm:$0xff]
    %v25 = vld [vmem:[%s1 + $0x10] sm:$0xff]
    %v26 = vld [vmem:[%s1 + $0x18] sm:$0xff]
    %v27 = vld [vmem:[%s2] sm:$0x1]
    %v29 = vlaneseq
    %v30 = vshrl.u32 %v29, 7
    %v31 = vsub.s32 0, %v30
    %v32 = vrot.slane %v27, %v31
    %vm34 = vcmask 261120
    %v36 = vsel %vm34, %v21, 0
    %v39 = vsel %vm34, %v22, 0
    %41 = vmatprep.subr.mxu0 0.0
    %42 = vmatpush1.msra.mxu0 0.0
    %43 = vmatprep.subr.mxu0 0.0
    %44 = vmatpush1.msra.mxu0 0.0
    %45 = vmatprep.subr.mxu0 0.0
    %46 = vmatpush1.msra.mxu0 0.0
    %47 = vmatprep.subr.mxu0 0.0
    %48 = vmatpush1.msra.mxu0 0.0
    %49 = vmatprep.subr.mxu0 0.0
    %50 = vmatpush1.msra.mxu0 0.0
    %51 = vmatprep.subr.mxu0 0.0
    %52 = vmatpush1.msra.mxu0 0.0
    %53 = vmatprep.subr.mxu0 0.0
    %54 = vmatpush1.msra.mxu0 0.0
    %55 = vmatprep.subr.mxu0 0.0
    %56 = vmatpush1.msra.mxu0 0.0
    %57 = vmatprep.subr.mxu0 0.0
    %58 = vmatpush1.msra.mxu0 0.0
    %59 = vmatprep.subr.mxu0 0.0
    %60 = vmatpush1.msra.mxu0 0.0
    %61 = vmatprep.subr.mxu0 0.0
    %62 = vmatpush1.msra.mxu0 0.0
    %63 = vmatprep.subr.mxu0 0.0
    %64 = vmatpush1.msra.mxu0 0.0
    %65 = vmatprep.subr.mxu0 0.0
    %66 = vmatpush1.msra.mxu0 %v26
    %67 = vmatprep.subr.mxu0 0.0
    %68 = vmatpush1.msra.mxu0 %v25
    %69 = vmatprep.subr.mxu0 0.0
    %70 = vmatpush1.msra.mxu0 %v24
    %71 = vmatprep.subr.mxu0 0.0
    %72 = vmatpush1.msra.mxu0 %v23
    %73 = vmatprep.subr.mxu0 0.0
    %74 = vmatpush2.msra.mxu0 0.0
    %75 = vmatprep.subr.mxu0 0.0
    %76 = vmatpush2.msra.mxu0 0.0
    %77 = vmatprep.subr.mxu0 0.0
    %78 = vmatpush2.msra.mxu0 0.0
    %79 = vmatprep.subr.mxu0 0.0
    %80 = vmatpush2.msra.mxu0 0.0
    %81 = vmatprep.subr.mxu0 0.0
    %82 = vmatpush2.msra.mxu0 0.0
    %83 = vmatprep.subr.mxu0 0.0
    %84 = vmatpush2.msra.mxu0 0.0
    %85 = vmatprep.subr.mxu0 0.0
    %86 = vmatpush2.msra.mxu0 0.0
    %87 = vmatprep.subr.mxu0 0.0
    %88 = vmatpush2.msra.mxu0 0.0
    %89 = vmatprep.subr.mxu0 0.0
    %90 = vmatpush2.msra.mxu0 0.0
    %91 = vmatprep.subr.mxu0 0.0
    %92 = vmatpush2.msra.mxu0 0.0
    %93 = vmatprep.subr.mxu0 0.0
    %94 = vmatpush2.msra.mxu0 0.0
    %95 = vmatprep.subr.mxu0 0.0
    %96 = vmatpush2.msra.mxu0 0.0
    %97 = vmatprep.subr.mxu0 0.0
    %98 = vmatpush2.msra.mxu0 0.0
    %99 = vmatprep.subr.mxu0 0.0
    %100 = vmatpush2.msra.mxu0 0.0
    %101 = vmatprep.subr.mxu0 0.0
    %102 = vmatpush2.msra.mxu0 0.0
    %103 = vmatprep.subr.mxu0 0.0
    %104 = vmatpush2.msra.mxu0 0.0
    %105 = vmatprep.mubr.f32.mxu0 0.0
    %106 = vmatmul.mubr.f32.gmra.mxu0 %v36
    %v107 = vpop.f32.mrf.mxu0
    %v108 = vadd.f32 %v32, %v107
    %v109 = vpop.f32.mrf.mxu0
    %110 = vmatprep.mubr.f32.mxu0 0.0
    %111 = vmatmul.mubr.f32.gmra.mxu0 %v39
    %v112 = vpop.f32.mrf.mxu0
    %v113 = vadd.f32 %v32, %v112
    %v114 = vpop.f32.mrf.mxu0
    %115 = vdwg.mxu0
    %v116 = vmax.f32 %v108, 0.0
    %v117 = vmax.f32 %v113, 0.0
    %v118 = vld [vmem:[%s3] sm:$0xff]
    %v119 = vld [vmem:[%s3 + $0x8] sm:$0xff]
    %v120 = vld [vmem:[%s3 + $0x10] sm:$0xff]
    %v121 = vld [vmem:[%s3 + $0x18] sm:$0xff]
    %v122 = vld [vmem:[%s3 + $0x20] sm:$0xff]
    %v123 = vld [vmem:[%s3 + $0x28] sm:$0xff]
    %v124 = vld [vmem:[%s3 + $0x30] sm:$0xff]
    %v125 = vld [vmem:[%s3 + $0x38] sm:$0xff]
    %v126 = vld [vmem:[%s4] sm:$0x1]
    %v128 = vlaneseq
    %v129 = vshrl.u32 %v128, 7
    %v130 = vsub.s32 0, %v129
    %v131 = vrot.slane %v126, %v130
    %vm133 = vcmask 523264
    %v135 = vsel %vm133, %v116, 0
    %v138 = vsel %vm133, %v117, 0
    %140 = vmatprep.subr.mxu0 0.0
    %141 = vmatpush1.msra.mxu0 0.0
    %142 = vmatprep.subr.mxu0 0.0
    %143 = vmatpush1.msra.mxu0 0.0
    %144 = vmatprep.subr.mxu0 0.0
    %145 = vmatpush1.msra.mxu0 0.0
    %146 = vmatprep.subr.mxu0 0.0
    %147 = vmatpush1.msra.mxu0 0.0
    %148 = vmatprep.subr.mxu0 0.0
    %149 = vmatpush1.msra.mxu0 0.0
    %150 = vmatprep.subr.mxu0 0.0
    %151 = vmatpush1.msra.mxu0 0.0
    %152 = vmatprep.subr.mxu0 0.0
    %153 = vmatpush1.msra.mxu0 0.0
    %154 = vmatprep.subr.mxu0 0.0
    %155 = vmatpush1.msra.mxu0 0.0
    %156 = vmatprep.subr.mxu0 0.0
    %157 = vmatpush1.msra.mxu0 %v125
    %158 = vmatprep.subr.mxu0 0.0
    %159 = vmatpush1.msra.mxu0 %v124
    %160 = vmatprep.subr.mxu0 0.0
    %161 = vmatpush1.msra.mxu0 %v123
    %162 = vmatprep.subr.mxu0 0.0
    %163 = vmatpush1.msra.mxu0 %v122
    %164 = vmatprep.subr.mxu0 0.0
    %165 = vmatpush1.msra.mxu0 %v121
    %166 = vmatprep.subr.mxu0 0.0
    %167 = vmatpush1.msra.mxu0 %v120
    %168 = vmatprep.subr.mxu0 0.0
    %169 = vmatpush1.msra.mxu0 %v119
    %170 = vmatprep.subr.mxu0 0.0
    %171 = vmatpush1.msra.mxu0 %v118
    %172 = vmatprep.subr.mxu0 0.0
    %173 = vmatpush2.msra.mxu0 0.0
    %174 = vmatprep.subr.mxu0 0.0
    %175 = vmatpush2.msra.mxu0 0.0
    %176 = vmatprep.subr.mxu0 0.0
    %177 = vmatpush2.msra.mxu0 0.0
    %178 = vmatprep.subr.mxu0 0.0
    %179 = vmatpush2.msra.mxu0 0.0
    %180 = vmatprep.subr.mxu0 0.0
    %181 = vmatpush2.msra.mxu0 0.0
    %182 = vmatprep.subr.mxu0 0.0
    %183 = vmatpush2.msra.mxu0 0.0
    %184 = vmatprep.subr.mxu0 0.0
    %185 = vmatpush2.msra.mxu0 0.0
    %186 = vmatprep.subr.mxu0 0.0
    %187 = vmatpush2.msra.mxu0 0.0
    %188 = vmatprep.subr.mxu0 0.0
    %189 = vmatpush2.msra.mxu0 0.0
    %190 = vmatprep.subr.mxu0 0.0
    %191 = vmatpush2.msra.mxu0 0.0
    %192 = vmatprep.subr.mxu0 0.0
    %193 = vmatpush2.msra.mxu0 0.0
    %194 = vmatprep.subr.mxu0 0.0
    %195 = vmatpush2.msra.mxu0 0.0
    %196 = vmatprep.subr.mxu0 0.0
    %197 = vmatpush2.msra.mxu0 0.0
    %198 = vmatprep.subr.mxu0 0.0
    %199 = vmatpush2.msra.mxu0 0.0
    %200 = vmatprep.subr.mxu0 0.0
    %201 = vmatpush2.msra.mxu0 0.0
    %202 = vmatprep.subr.mxu0 0.0
    %203 = vmatpush2.msra.mxu0 0.0
    %204 = vmatprep.mubr.f32.mxu0 0.0
    %205 = vmatmul.mubr.f32.gmra.mxu0 %v135
    %v206 = vpop.f32.mrf.mxu0
    %v207 = vadd.f32 %v131, %v206
    %v208 = vpop.f32.mrf.mxu0
    %209 = vmatprep.mubr.f32.mxu0 0.0
    %210 = vmatmul.mubr.f32.gmra.mxu0 %v138
    %v211 = vpop.f32.mrf.mxu0
    %v212 = vadd.f32 %v131, %v211
    %v213 = vpop.f32.mrf.mxu0
    %214 = vdwg.mxu0
    %vm215 = vcmask 130048
    %216 = vst.msk [vmem:[#allocation2] sm:$0xff] %vm215, %v207
    %217 = vst.msk [vmem:[#allocation2 + $0x8] sm:$0xff] %vm215, %v212
    // Predicated region
    $region22: #{tpu_custom_call.1} parent=1 // pred_check
      _
    $region23: #{tpu_custom_call.1} parent=1 // pred_check_branch
      %219 = sbr.rel (0) target = $region25
    $region24: #{tpu_custom_call.1} parent=1 // pred_region
      %s221 = ssub.s32 256, 256
      %222 = vsyncadd [#allocation3], %s221
      %s223 = sshll.u32 [#allocation2], 4
      %s224 = int_to_ptr.vmem [resolvable:$true] %s223
      %229 = dma.vmem_to_hbm [thread:$0]  %s224, 256, %s5, [#allocation3], 128, 128, 8
    $region25: #{tpu_custom_call.1} parent=1 // pred_fallthru
      _
    // Predicated region
    $region26: #{tpu_custom_call.1} parent=1 // pred_check
      _
    $region27: #{tpu_custom_call.1} parent=1 // pred_check_branch
      %231 = sbr.rel (0) target = $region29
    $region28: #{tpu_custom_call.1} parent=1 // pred_region
      %232 = dma.done [#allocation3], 256
    $region29: #{tpu_custom_call.1} parent=1 // pred_fallthru
      _
    %233 = vsyncpa [#allocation3], 1

</llo_original>
